<compile_context>
chip_gen: v5e
topology: v5e:2x2
jax: 0.10.0
libtpu: 0.0.40
codegen_flags: <defaults>
</compile_context>

<pallas_src>
import functools

import jax
import jax.numpy as jnp
from jax.experimental import pallas as pl
from jax.experimental.pallas import tpu as pltpu

EPS = 1e-5
_LANES = 128


@functools.lru_cache(maxsize=None)
def _vmem_capacity_bytes():
    """Per-TensorCore VMEM capacity; conservative fallback if the query fails."""
    try:
        info = pltpu.get_tpu_info()
        for name in ("vmem_capacity_bytes", "vmem_size_bytes", "vmem_bytes"):
            cap = getattr(info, name, None)
            if cap:
                return int(cap)
    except Exception:
        pass
    return 64 * 1024 * 1024  # v7x per-TC VMEM (smallest of v5e/v6e/v7x)


def _lane_fold(n, c):
    """How many C-channel rows can be packed into one 128-lane row."""
    if c <= _LANES and _LANES % c == 0:
        f = _LANES // c
        if n % f == 0:
            return f
    return 1


# ----------------------------------------------------------------------------
# Resident path: single kernel, x read from HBM exactly once.
# ----------------------------------------------------------------------------
def _bn_resident_kernel(x_ref, gamma_ref, beta_ref, y_ref, *, fold, n_total):
    # x_ref / y_ref: (R, W) lane-dense slab (W = fold * C); gamma/beta: (1, C).
    x = x_ref[...].astype(jnp.float32)
    w = x.shape[1]
    c = w // fold
    inv_n = 1.0 / n_total

    # Per-lane partial sums, then fold the `fold` lane-groups -> per-channel.
    s = jnp.sum(x, axis=0, keepdims=True)                  # (1, W)
    s_c = s[:, :c]
    for g in range(1, fold):
        s_c = s_c + s[:, g * c:(g + 1) * c]                # (1, C)
    mean_c = s_c * inv_n

    if fold > 1:
        mean_w = jnp.concatenate([mean_c] * fold, axis=1)  # (1, W)
    else:
        mean_w = mean_c

    # Stable centered variance (x is resident, so the 2nd pass is free of HBM).
    centered = x - mean_w
    sq = jnp.sum(centered * centered, axis=0, keepdims=True)
    sq_c = sq[:, :c]
    for g in range(1, fold):
        sq_c = sq_c + sq[:, g * c:(g + 1) * c]
    var_c = sq_c * inv_n                                   # biased variance

    # Fold affine into a single FMA: y = x * scale + bias.
    scale_c = gamma_ref[...] * jax.lax.rsqrt(var_c + EPS)
    bias_c = beta_ref[...] - mean_c * scale_c
    if fold > 1:
        scale_w = jnp.concatenate([scale_c] * fold, axis=1)
        bias_w = jnp.concatenate([bias_c] * fold, axis=1)
    else:
        scale_w, bias_w = scale_c, bias_c

    y_ref[...] = (x * scale_w + bias_w).astype(y_ref.dtype)


# ----------------------------------------------------------------------------
# Streaming path: pass 1 (stats) + pass 2 (normalize), row-tiled & pipelined.
# ----------------------------------------------------------------------------
def _bn_stats_kernel(x_ref, sum_ref, sq_ref, *, valid_rows, block_rows):
    i = pl.program_id(0)

    @pl.when(i == 0)
    def _():
        sum_ref[...] = jnp.zeros_like(sum_ref)
        sq_ref[...] = jnp.zeros_like(sq_ref)

    x = x_ref[...].astype(jnp.float32)                     # (TR, W)
    if valid_rows % block_rows != 0:
        # Zero the padded rows of the last tile before accumulation.
        row_idx = i * block_rows + jax.lax.broadcasted_iota(jnp.int32, x.shape, 0)
        x = jnp.where(row_idx < valid_rows, x, 0.0)

    sum_ref[...] += jnp.sum(x, axis=0, keepdims=True)
    sq_ref[...] += jnp.sum(x * x, axis=0, keepdims=True)


def _bn_normalize_kernel(x_ref, scale_ref, bias_ref, y_ref):
    x = x_ref[...].astype(jnp.float32)
    y_ref[...] = (x * scale_ref[...] + bias_ref[...]).astype(y_ref.dtype)


# ----------------------------------------------------------------------------
# Wrapper
# ----------------------------------------------------------------------------
@functools.partial(jax.jit, static_argnames=("mode", "block_rows"))
def bn_lastdim(x, gamma, beta, *, mode=None, block_rows=None):
    """Training-mode nn.BatchNorm1d over the LAST dim of x: (B, L, C) -> (B, L, C)."""
    B, L, C = x.shape
    N = B * L

    fold = _lane_fold(N, C)          # lane-dense packing factor (power of 2)
    W = C * fold
    R = N // fold
    x2 = x.reshape(R, W)             # contiguous => free lane-dense view

    cap = _vmem_capacity_bytes()
    itemsize = x.dtype.itemsize
    resident_bytes = 2 * N * C * itemsize + N * C * 4 + (1 << 20)
    if mode is None:
        # Resident (1 HBM read) when it comfortably fits this generation's VMEM,
        # streaming (2 reads + 1 write, pipelined) otherwise.
        mode = "resident" if resident_bytes <= cap // 2 else "streaming"

    gamma_f = gamma.astype(jnp.float32).reshape(1, C)
    beta_f = beta.astype(jnp.float32).reshape(1, C)

    if mode == "resident":
        kern = functools.partial(_bn_resident_kernel, fold=fold, n_total=float(N))
        y2 = pl.pallas_call(
            kern,
            out_shape=jax.ShapeDtypeStruct((R, W), x.dtype),
            in_specs=[pl.BlockSpec(memory_space=pltpu.MemorySpace.VMEM)] * 3,
            out_specs=pl.BlockSpec(memory_space=pltpu.MemorySpace.VMEM),
            input_output_aliases={0: 0},
            compiler_params=pltpu.CompilerParams(
                vmem_limit_bytes=min(int(0.9 * cap), resident_bytes + (32 << 20))),
        )(x2, gamma_f, beta_f)
        return y2.reshape(B, L, C)

    # -------- streaming two-pass --------
    tr = min(block_rows if block_rows is not None else 1024, R)
    if tr != R:
        tr = max(8, (tr // 8) * 8)    # second-to-last block dim: multiple of 8
    num_blocks = (R + tr - 1) // tr
    stream_vmem = min(int(0.9 * cap), 32 << 20)

    stats = functools.partial(_bn_stats_kernel, valid_rows=R, block_rows=tr)
    sum_w, sq_w = pl.pallas_call(
        stats,
        out_shape=(jax.ShapeDtypeStruct((1, W), jnp.float32),
                   jax.ShapeDtypeStruct((1, W), jnp.float32)),
        grid=(num_blocks,),
        in_specs=[pl.BlockSpec((tr, W), lambda i: (i, 0))],
        out_specs=(pl.BlockSpec((1, W), lambda i: (0, 0)),
                   pl.BlockSpec((1, W), lambda i: (0, 0))),
        compiler_params=pltpu.CompilerParams(
            dimension_semantics=("arbitrary",),
            vmem_limit_bytes=stream_vmem),
    )(x2)

    # Tiny O(C) fold + affine (left to XLA): lane-groups -> channels, then
    # scale = gamma * inv_std, bias = beta - mean * scale, re-tiled lane-dense.
    sum_c = sum_w.reshape(fold, C).sum(axis=0)
    sq_c = sq_w.reshape(fold, C).sum(axis=0)
    mean = sum_c / N                                        # true N
    var = jnp.maximum(sq_c / N - mean * mean, 0.0)          # biased variance
    scale = gamma_f.reshape(C) * jax.lax.rsqrt(var + EPS)
    bias = beta_f.reshape(C) - mean * scale
    scale_w = jnp.tile(scale.reshape(1, C), (1, fold))
    bias_w = jnp.tile(bias.reshape(1, C), (1, fold))

    y2 = pl.pallas_call(
        _bn_normalize_kernel,
        out_shape=jax.ShapeDtypeStruct((R, W), x.dtype),
        grid=(num_blocks,),
        in_specs=[pl.BlockSpec((tr, W), lambda i: (i, 0)),
                  pl.BlockSpec((1, W), lambda i: (0, 0)),
                  pl.BlockSpec((1, W), lambda i: (0, 0))],
        out_specs=pl.BlockSpec((tr, W), lambda i: (i, 0)),
        input_output_aliases={0: 0},   # x is dead after this op
        compiler_params=pltpu.CompilerParams(
            dimension_semantics=("parallel",),
            vmem_limit_bytes=stream_vmem),
    )(x2, scale_w, bias_w)
    return y2.reshape(B, L, C)


# ----------------------------------------------------------------------------
# Reference & tests
# ----------------------------------------------------------------------------
def _reference(x, gamma, beta):
    xf = x.astype(jnp.float32)
    mean = jnp.mean(xf, axis=(0, 1), keepdims=True)
    var = jnp.mean((xf - mean) ** 2, axis=(0, 1), keepdims=True)
    y = (xf - mean) / jnp.sqrt(var + EPS) * gamma + beta
    return y.astype(x.dtype)


def _check(x, gamma, beta, **kw):
    y = jax.block_until_ready(bn_lastdim(x, gamma, beta, **kw))
    y_ref = _reference(x, gamma, beta)
    assert y.shape == x.shape and y.dtype == x.dtype
    err = float(jnp.max(jnp.abs(y.astype(jnp.float32) - y_ref.astype(jnp.float32))))
    assert bool(jnp.allclose(y, y_ref, atol=5e-5, rtol=5e-5)), f"max abs err {err}"


if __name__ == "__main__":
    key = jax.random.PRNGKey(0)
    k1, k2, k3, k4 = jax.random.split(key, 4)

    # Small shape consistent with the module's BN_lastdim usage (B, K, hidden).
    B, L, C = 2, 16, 32
    x_small = jax.random.normal(k1, (B, L, C), dtype=jnp.float32)
    gamma0 = jnp.ones((C,), jnp.float32)     # nn.BatchNorm1d default init
    beta0 = jnp.zeros((C,), jnp.float32)
    _check(x_small, gamma0, beta0)           # auto -> resident, lane-dense fold=4

    # Non-default affine to validate the channel <-> lane-group mapping.
    gamma1 = jax.random.normal(k2, (C,), jnp.float32) * 0.5 + 1.0
    beta1 = jax.random.normal(k3, (C,), jnp.float32)
    _check(x_small, gamma1, beta1)

    # Larger slab through the streaming two-pass path: exercises row tiling,
    # edge-tile masking and the "parallel" normalize pass (+ i/o aliasing).
    x_big = jax.random.normal(k4, (2, 2048, C), dtype=jnp.float32)
    _check(x_big, gamma1, beta1, mode="streaming", block_rows=384)

    # Fallback (non-lane-dense) layout: N not divisible by 128 // C.
    x_odd = jax.random.normal(k1, (2, 15, C), dtype=jnp.float32)
    _check(x_odd, gamma1, beta1)

    print("KERNEL_OK")
</pallas_src>

<mosaic_0001>
module attributes {stable_mosaic.version = 11 : i64} {
  func.func @_bn_resident_kernel(%arg0: memref<8x128xf32, #tpu.memory_space<vmem>>, %arg1: memref<1x32xf32, #tpu.memory_space<vmem>>, %arg2: memref<1x32xf32, #tpu.memory_space<vmem>>, %arg3: memref<8x128xf32, #tpu.memory_space<vmem>>) attributes {dimension_semantics = [], scalar_prefetch = 0 : i64, scratch_operands = 0 : i64, tpu.core_type = #tpu.core_type<tc>} {
    %c0 = arith.constant 0 : index
    %c0_0 = arith.constant 0 : index
    %0 = vector.load %arg0[%c0, %c0_0] : memref<8x128xf32, #tpu.memory_space<vmem>>, vector<8x128xf32>
    %cst = arith.constant dense<0.000000e+00> : vector<128xf32>
    %1 = vector.multi_reduction <add>, %0, %cst [0] : vector<8x128xf32> to vector<128xf32>
    %2 = vector.shape_cast %1 : vector<128xf32> to vector<1x128xf32>
    %3 = vector.extract_strided_slice %2 {offsets = [0, 0], sizes = [1, 32], strides = [1, 1]} : vector<1x128xf32> to vector<1x32xf32>
    %4 = vector.extract_strided_slice %2 {offsets = [0, 32], sizes = [1, 32], strides = [1, 1]} : vector<1x128xf32> to vector<1x32xf32>
    %5 = arith.addf %3, %4 : vector<1x32xf32>
    %6 = vector.extract_strided_slice %2 {offsets = [0, 64], sizes = [1, 32], strides = [1, 1]} : vector<1x128xf32> to vector<1x32xf32>
    %7 = arith.addf %5, %6 : vector<1x32xf32>
    %8 = vector.extract_strided_slice %2 {offsets = [0, 96], sizes = [1, 32], strides = [1, 1]} : vector<1x128xf32> to vector<1x32xf32>
    %9 = arith.addf %7, %8 : vector<1x32xf32>
    %cst_1 = arith.constant 3.125000e-02 : f32
    %10 = vector.broadcast %cst_1 : f32 to vector<1x32xf32>
    %11 = arith.mulf %9, %10 : vector<1x32xf32>
    %12 = tpu.concatenate %11, %11, %11, %11 in 1 : vector<1x32xf32>, vector<1x32xf32>, vector<1x32xf32>, vector<1x32xf32> -> vector<1x128xf32>
    %13 = vector.broadcast %12 : vector<1x128xf32> to vector<8x128xf32>
    %14 = arith.subf %0, %13 : vector<8x128xf32>
    %15 = arith.mulf %14, %14 : vector<8x128xf32>
    %cst_2 = arith.constant dense<0.000000e+00> : vector<128xf32>
    %16 = vector.multi_reduction <add>, %15, %cst_2 [0] : vector<8x128xf32> to vector<128xf32>
    %17 = vector.shape_cast %16 : vector<128xf32> to vector<1x128xf32>
    %18 = vector.extract_strided_slice %17 {offsets = [0, 0], sizes = [1, 32], strides = [1, 1]} : vector<1x128xf32> to vector<1x32xf32>
    %19 = vector.extract_strided_slice %17 {offsets = [0, 32], sizes = [1, 32], strides = [1, 1]} : vector<1x128xf32> to vector<1x32xf32>
    %20 = arith.addf %18, %19 : vector<1x32xf32>
    %21 = vector.extract_strided_slice %17 {offsets = [0, 64], sizes = [1, 32], strides = [1, 1]} : vector<1x128xf32> to vector<1x32xf32>
    %22 = arith.addf %20, %21 : vector<1x32xf32>
    %23 = vector.extract_strided_slice %17 {offsets = [0, 96], sizes = [1, 32], strides = [1, 1]} : vector<1x128xf32> to vector<1x32xf32>
    %24 = arith.addf %22, %23 : vector<1x32xf32>
    %cst_3 = arith.constant 3.125000e-02 : f32
    %25 = vector.broadcast %cst_3 : f32 to vector<1x32xf32>
    %26 = arith.mulf %24, %25 : vector<1x32xf32>
    %c0_4 = arith.constant 0 : index
    %c0_5 = arith.constant 0 : index
    %27 = vector.load %arg1[%c0_4, %c0_5] : memref<1x32xf32, #tpu.memory_space<vmem>>, vector<1x32xf32>
    %cst_6 = arith.constant 9.99999974E-6 : f32
    %28 = vector.broadcast %cst_6 : f32 to vector<1x32xf32>
    %29 = arith.addf %26, %28 : vector<1x32xf32>
    %30 = math.rsqrt %29 : vector<1x32xf32>
    %31 = arith.mulf %27, %30 : vector<1x32xf32>
    %c0_7 = arith.constant 0 : index
    %c0_8 = arith.constant 0 : index
    %32 = vector.load %arg2[%c0_7, %c0_8] : memref<1x32xf32, #tpu.memory_space<vmem>>, vector<1x32xf32>
    %33 = arith.mulf %11, %31 : vector<1x32xf32>
    %34 = arith.subf %32, %33 : vector<1x32xf32>
    %35 = tpu.concatenate %31, %31, %31, %31 in 1 : vector<1x32xf32>, vector<1x32xf32>, vector<1x32xf32>, vector<1x32xf32> -> vector<1x128xf32>
    %36 = tpu.concatenate %34, %34, %34, %34 in 1 : vector<1x32xf32>, vector<1x32xf32>, vector<1x32xf32>, vector<1x32xf32> -> vector<1x128xf32>
    %37 = vector.broadcast %35 : vector<1x128xf32> to vector<8x128xf32>
    %38 = arith.mulf %0, %37 : vector<8x128xf32>
    %39 = vector.broadcast %36 : vector<1x128xf32> to vector<8x128xf32>
    %40 = arith.addf %38, %39 : vector<8x128xf32>
    %c0_9 = arith.constant 0 : index
    %c0_10 = arith.constant 0 : index
    %41 = vector.load %arg3[%c0_9, %c0_10] : memref<8x128xf32, #tpu.memory_space<vmem>>, vector<8x128xf32>
    tpu.vector_store %arg3[%c0_9, %c0_10], %40 {strides = array<i32>} : memref<8x128xf32, #tpu.memory_space<vmem>>, vector<8x128xf32>,
    return
  }
}

</mosaic_0001>

<llo_original>
// kernel: bn_lastdim.1
$region0: #{bn_lastdim.1}
  #allocation0 [shape = 'u32[]', space=smem, size = 0x4, offset = 0x4, fixed_abs, tag = 'smem constant byte address 0x4 - core index']
  #allocation1 [shape = 'u32[72,128]{1,0:T(1,128)}', space=vmem, size = 0x9000, scoped, tag = 'internal scratch']
  %s0 = inlined_call_operand.vmem [shape: f32[8,128], index: 0, kind: input, shape index: {}, may-alias: {0,3}]
  %s1 = inlined_call_operand.vmem [shape: f32[1,32], index: 1, kind: input, shape index: {}]
  %s2 = inlined_call_operand.vmem [shape: f32[1,32], index: 2, kind: input, shape index: {}]
  %s3 = inlined_call_operand.vmem [shape: f32[8,128], index: 3, kind: output, shape index: {}, may-alias: {0,3}]
  %s4 = sld [smem:[#allocation0]]
  $region22: #{bn_lastdim.1} parent=0
    _
  %s6 = ssub.s32 1, %s4
  %s7 = scalar_select 0, %s6, %s4
  // Predicated region
  $region2: #{bn_lastdim.1} parent=0 // pred_check
    _
  $region3: #{bn_lastdim.1} parent=0 // pred_check_branch
    %9 = sbr.rel (0) target = $region5
  $region4: #{bn_lastdim.1} parent=0 // pred_region
    _
  $region5: #{bn_lastdim.1} parent=0 // pred_fallthru
    _
  // Predicated region
  $region6: #{bn_lastdim.1} parent=0 // pred_check
    _
  $region7: #{bn_lastdim.1} parent=0 // pred_check_branch
    %11 = sbr.rel (0) target = $region9
  $region8: #{bn_lastdim.1} parent=0 // pred_region
    _
  $region9: #{bn_lastdim.1} parent=0 // pred_fallthru
    _
  // Predicated region
  $region10: #{bn_lastdim.1} parent=0 // pred_check
    _
  $region11: #{bn_lastdim.1} parent=0 // pred_check_branch
    %13 = sbr.rel (0) target = $region13
  $region12: #{bn_lastdim.1} parent=0 // pred_region
    _
  $region13: #{bn_lastdim.1} parent=0 // pred_fallthru
    _
  %v14 = vld [vmem:[%s0] sm:$0xff]
  %v15 = vrot.slane %v14, 4
  %v16 = vadd.f32 %v14, %v15
  %v17 = vrot.slane %v16, 2
  %v18 = vadd.f32 %v16, %v17
  %v19 = vrot.slane %v18, 1
  %v20 = vadd.f32 %v18, %v19
  %22 = vrot.lane.b32.xlu0 %v20, 96
  %v23 = vpop.permute.xlu0 %22
  %v25 = vadd.f32 %v20, %v23
  %26 = vrot.lane.b32.xlu0 %v20, 64
  %v27 = vpop.permute.xlu0 %26
  %v29 = vadd.f32 %v25, %v27
  %30 = vrot.lane.b32.xlu0 %v20, 32
  %v31 = vpop.permute.xlu0 %30
  %v33 = vadd.f32 %v29, %v31
  %v34 = vmul.f32 %v33, 0.03125
  %36 = vrot.lane.b32.xlu0 %v34, 32
  %v37 = vpop.permute.xlu0 %36
  %39 = vrot.lane.b32.xlu0 %v34, 64
  %v40 = vpop.permute.xlu0 %39
  %42 = vrot.lane.b32.xlu0 %v34, 96
  %v43 = vpop.permute.xlu0 %42
  %vm45 = vcmask 261120
  %v46 = vsel %vm45, %v34, %v37
  %vm47 = vcmask 523264
  %v48 = vsel %vm47, %v46, %v40
  %vm49 = vcmask 785408
  %v50 = vsel %vm49, %v48, %v43
  %v51 = vperm.slane %v50, 0
  %v52 = vsub.f32 %v14, %v51
  %v53 = vmul.f32 %v52, %v52
  %v54 = vrot.slane %v53, 4
  %v55 = vadd.f32 %v53, %v54
  %v56 = vrot.slane %v55, 2
  %v57 = vadd.f32 %v55, %v56
  %v58 = vrot.slane %v57, 1
  %v59 = vadd.f32 %v57, %v58
  %61 = vrot.lane.b32.xlu0 %v59, 96
  %v62 = vpop.permute.xlu0 %61
  %v64 = vadd.f32 %v59, %v62
  %65 = vrot.lane.b32.xlu0 %v59, 64
  %v66 = vpop.permute.xlu0 %65
  %v68 = vadd.f32 %v64, %v66
  %69 = vrot.lane.b32.xlu0 %v59, 32
  %v70 = vpop.permute.xlu0 %69
  %v72 = vadd.f32 %v68, %v70
  %v73 = vmul.f32 %v72, 0.03125
  %v74 = vld [vmem:[%s1] sm:$0x1]
  %v75 = vadd.f32 %v73, 1e-05
  %v76 = vrsqrt.pop %v75
  %v77 = vmul.f32 %v76, %v75
  %v78 = vmul.f32 %v77, %v76
  %v79 = vmul.f32 0.5, %v78
  %v80 = vsub.f32 1.5, %v79
  %v81 = vmul.f32 %v76, %v80
  %vm82 = vweird.f32 %v75
  %vm83 = vweird.f32 %v76
  %vm84 = vmor %vm82, %vm83
  %v85 = vsel %vm84, %v76, %v81
  %v86 = vmul.f32 %v74, %v85
  %v87 = vld [vmem:[%s2] sm:$0x1]
  %v88 = vmul.f32 %v34, %v86
  %v89 = vsub.f32 %v87, %v88
  %v91 = vperm.slane %v86, 0
  %92 = vrot.lane.b32.xlu0 %v91, 32
  %v93 = vpop.permute.xlu0 %92
  %95 = vrot.lane.b32.xlu0 %v91, 64
  %v96 = vpop.permute.xlu0 %95
  %98 = vrot.lane.b32.xlu0 %v91, 96
  %v99 = vpop.permute.xlu0 %98
  %v101 = vsel %vm45, %v86, %v93
  %v102 = vsel %vm47, %v101, %v96
  %v103 = vsel %vm49, %v102, %v99
  %v105 = vperm.slane %v89, 0
  %106 = vrot.lane.b32.xlu0 %v105, 32
  %v107 = vpop.permute.xlu0 %106
  %109 = vrot.lane.b32.xlu0 %v105, 64
  %v110 = vpop.permute.xlu0 %109
  %112 = vrot.lane.b32.xlu0 %v105, 96
  %v113 = vpop.permute.xlu0 %112
  %v115 = vsel %vm45, %v89, %v107
  %v116 = vsel %vm47, %v115, %v110
  %v117 = vsel %vm49, %v116, %v113
  %v118 = vperm.slane %v103, 0
  %v119 = vmul.f32 %v14, %v118
  %v120 = vperm.slane %v117, 0
  %v121 = vadd.f32 %v119, %v120
  %122 = vst [vmem:[%s3] sm:$0xff] %v121
  // Predicated region
  $region14: #{bn_lastdim.1} parent=0 // pred_check
    _
  $region15: #{bn_lastdim.1} parent=0 // pred_check_branch
    %124 = sbr.rel (0) target = $region17
  $region16: #{bn_lastdim.1} parent=0 // pred_region
    _
  $region17: #{bn_lastdim.1} parent=0 // pred_fallthru
    _
  // Predicated region
  $region18: #{bn_lastdim.1} parent=0 // pred_check
    _
  $region19: #{bn_lastdim.1} parent=0 // pred_check_branch
    %126 = sbr.rel (0) target = $region21
  $region20: #{bn_lastdim.1} parent=0 // pred_region
    _
  $region21: #{bn_lastdim.1} parent=0 // pred_fallthru
    _

</llo_original>
